<compile_context>
chip_gen: v7x
topology: tpu7x:2x2x1
jax: 0.10.0
libtpu: 0.0.40
codegen_flags: <defaults>
</compile_context>

<pallas_src>
import jax
import jax.numpy as jnp
from jax.experimental import pallas as pl
from jax.experimental.pallas import tpu as pltpu


def _round_up(x, m):
    return (x + m - 1) // m * m


def _patch_embed_kernel(x_ref, w_ref, b_ref, o_ref):
    # x_ref: (TM, K) flattened patches, w_ref: (K, E), b_ref: (1, E) f32
    acc = jnp.dot(x_ref[...], w_ref[...], preferred_element_type=jnp.float32)
    o_ref[...] = (acc + b_ref[...]).astype(o_ref.dtype)


def patch_embed_forward(x, weight, bias, patch_size, *, compute_dtype=None,
                        tile_m=512):
    """
    x:      (B, C, H, W)  (NCHW, like PyTorch)
    weight: (E, C, P, P)  (PyTorch Conv2d weight layout)
    bias:   (E,)
    compute_dtype: optionally cast matmul inputs (e.g. jnp.bfloat16 for the
        v6e/v7x 256x256 MXU). Accumulation is always f32.
    returns (B, num_patches, E) == conv(x).flatten(2).transpose(1, 2)
    """
    B, C, H, W = x.shape
    E = weight.shape[0]
    P = patch_size
    Hp, Wp = H // P, W // P
    num_patches = Hp * Wp

    out_dtype = x.dtype
    in_dtype = compute_dtype if compute_dtype is not None else x.dtype

    # Patch extraction (layout plumbing; fused into the kernel's input DMA via
    # allow_input_fusion so it is not a separate full-HBM round trip).
    xp = x.reshape(B, C, Hp, P, Wp, P)
    xp = jnp.transpose(xp, (0, 2, 4, 1, 3, 5))                    # (B,Hp,Wp,C,P,P)
    xp = xp.reshape(B * num_patches, C * P * P).astype(in_dtype)  # (M, K)

    wm = weight.reshape(E, C * P * P).T.astype(in_dtype)          # (K, E)
    bm = bias.reshape(1, E).astype(jnp.float32)                   # (1, E)

    M, K = xp.shape

    # Lane/sublane alignment: K, E -> multiples of 128; M -> multiple of TM.
    K_pad = _round_up(K, 128)
    E_pad = _round_up(E, 128)
    TM = min(tile_m, _round_up(M, 8))
    M_pad = _round_up(M, TM)

    if (M_pad, K_pad) != (M, K):
        xp = jnp.pad(xp, ((0, M_pad - M), (0, K_pad - K)))
    if (K_pad, E_pad) != (K, E):
        wm = jnp.pad(wm, ((0, K_pad - K), (0, E_pad - E)))
    if E_pad != E:
        bm = jnp.pad(bm, ((0, 0), (0, E_pad - E)))

    grid_m = M_pad // TM
    in_bytes = jnp.dtype(in_dtype).itemsize
    out_bytes = jnp.dtype(out_dtype).itemsize
    cost = pl.CostEstimate(
        flops=2 * M_pad * K_pad * E_pad,
        transcendentals=0,
        bytes_accessed=(M_pad * K_pad + K_pad * E_pad) * in_bytes
        + M_pad * E_pad * out_bytes,
    )

    out = pl.pallas_call(
        _patch_embed_kernel,
        out_shape=jax.ShapeDtypeStruct((M_pad, E_pad), out_dtype),
        grid_spec=pltpu.PrefetchScalarGridSpec(
            num_scalar_prefetch=0,
            grid=(grid_m,),
            in_specs=[
                pl.BlockSpec((TM, K_pad), lambda i: (i, 0)),
                # Grid-invariant blocks -> kept resident in VMEM (no re-DMA).
                pl.BlockSpec((K_pad, E_pad), lambda i: (0, 0)),
                pl.BlockSpec((1, E_pad), lambda i: (0, 0)),
            ],
            out_specs=pl.BlockSpec((TM, E_pad), lambda i: (i, 0)),
        ),
        compiler_params=pltpu.CompilerParams(
            dimension_semantics=("parallel",),         # megacore-shardable
            vmem_limit_bytes=48 * 1024 * 1024,         # fits v5e/v6e/v7x
            allow_input_fusion=[True, False, False],   # fuse patch transpose
        ),
        cost_estimate=cost,
    )(xp, wm, bm)

    return out[:M, :E].reshape(B, num_patches, E)


if __name__ == "__main__":
    # Small, module-consistent shapes: img_size=16, patch_size=4,
    # in_channels=4, embed_dim=32, batch=2 -> num_patches = (16//4)**2 = 16.
    B, C, H, W = 2, 4, 16, 16
    P = 4
    E = 32

    key = jax.random.PRNGKey(0)
    kx, kw, kb = jax.random.split(key, 3)
    x = jax.random.normal(kx, (B, C, H, W), dtype=jnp.float32)
    weight = jax.random.normal(kw, (E, C, P, P), dtype=jnp.float32) * 0.02
    bias = jax.random.normal(kb, (E,), dtype=jnp.float32) * 0.02

    out = jax.block_until_ready(patch_embed_forward(x, weight, bias, P))

    # Reference: strided conv == per-patch matmul.
    Hp, Wp = H // P, W // P
    xp = jnp.transpose(x.reshape(B, C, Hp, P, Wp, P), (0, 2, 4, 1, 3, 5))
    ref = xp.reshape(B, Hp * Wp, C * P * P) @ weight.reshape(E, -1).T + bias

    assert out.shape == (B, Hp * Wp, E)
    assert jnp.allclose(out, ref, atol=1e-4, rtol=1e-4)

    # bf16 compute path (v6e/v7x MXU-native), f32 accumulation.
    out_bf16 = jax.block_until_ready(
        patch_embed_forward(x, weight, bias, P, compute_dtype=jnp.bfloat16))
    assert out_bf16.shape == (B, Hp * Wp, E)
    assert jnp.allclose(out_bf16, ref, atol=5e-2, rtol=5e-2)

    print("KERNEL_OK")
</pallas_src>

<mosaic_0001>
module attributes {stable_mosaic.version = 11 : i64} {
  func.func @_patch_embed_kernel(%arg0: i32, %arg1: memref<32x128xf32, #tpu.memory_space<vmem>>, %arg2: memref<128x128xf32, #tpu.memory_space<vmem>>, %arg3: memref<1x128xf32, #tpu.memory_space<vmem>>, %arg4: memref<32x128xf32, #tpu.memory_space<vmem>>) attributes {dimension_semantics = [#tpu.dimension_semantics<parallel>], iteration_bounds = array<i64: 1>, scalar_prefetch = 0 : i64, scratch_operands = 0 : i64, tpu.core_type = #tpu.core_type<tc>, window_params = [{transform_indices = @transform_0, window_bounds = array<i64: 32, 128>}, {pipeline_mode = #tpu.pipeline_mode<synchronous>, transform_indices = @transform_1, window_bounds = array<i64: 128, 128>}, {pipeline_mode = #tpu.pipeline_mode<synchronous>, transform_indices = @transform_2, window_bounds = array<i64: 1, 128>}, {transform_indices = @transform_3, window_bounds = array<i64: 32, 128>}]} {
    %c0 = arith.constant 0 : index
    %c0_0 = arith.constant 0 : index
    %0 = vector.load %arg1[%c0, %c0_0] : memref<32x128xf32, #tpu.memory_space<vmem>>, vector<32x128xf32>
    %c0_1 = arith.constant 0 : index
    %c0_2 = arith.constant 0 : index
    %1 = vector.load %arg2[%c0_1, %c0_2] : memref<128x128xf32, #tpu.memory_space<vmem>>, vector<128x128xf32>
    %cst = arith.constant dense<0.000000e+00> : vector<32x128xf32>
    %2 = tpu.matmul %0, %1, %cst {dimension_numbers = #tpu.dot_dimension_numbers<[1], [0], [0], [1], [0, 0, 1, 1], [], []>} : vector<32x128xf32>, vector<128x128xf32>, vector<32x128xf32> -> vector<32x128xf32>
    %c0_3 = arith.constant 0 : index
    %c0_4 = arith.constant 0 : index
    %3 = vector.load %arg3[%c0_3, %c0_4] : memref<1x128xf32, #tpu.memory_space<vmem>>, vector<1x128xf32>
    %4 = vector.broadcast %3 : vector<1x128xf32> to vector<32x128xf32>
    %5 = arith.addf %2, %4 : vector<32x128xf32>
    %c0_5 = arith.constant 0 : index
    %c0_6 = arith.constant 0 : index
    %6 = vector.load %arg4[%c0_5, %c0_6] : memref<32x128xf32, #tpu.memory_space<vmem>>, vector<32x128xf32>
    tpu.vector_store %arg4[%c0_5, %c0_6], %5 {strides = array<i32>} : memref<32x128xf32, #tpu.memory_space<vmem>>, vector<32x128xf32>,
    return
  }
  func.func @transform_0(%arg0: i32) -> (i32, i32) {
    %c0_i32 = arith.constant 0 : i32
    %c0_i32_0 = arith.constant 0 : i32
    return %arg0, %c0_i32 : i32, i32
  }
  func.func @transform_1(%arg0: i32) -> (i32, i32) {
    %c0_i32 = arith.constant 0 : i32
    %c0_i32_0 = arith.constant 0 : i32
    %c0_i32_1 = arith.constant 0 : i32
    return %c0_i32, %c0_i32_0 : i32, i32
  }
  func.func @transform_2(%arg0: i32) -> (i32, i32) {
    %c0_i32 = arith.constant 0 : i32
    %c0_i32_0 = arith.constant 0 : i32
    %c0_i32_1 = arith.constant 0 : i32
    return %c0_i32, %c0_i32_0 : i32, i32
  }
  func.func @transform_3(%arg0: i32) -> (i32, i32) {
    %c0_i32 = arith.constant 0 : i32
    %c0_i32_0 = arith.constant 0 : i32
    return %arg0, %c0_i32 : i32, i32
  }
}

</mosaic_0001>

<llo_original>
// kernel: tpu_custom_call.1
$region0: #{tpu_custom_call.1}
  #allocation0 [shape = 'u32[]', space=smem, size = 0x4, offset = 0x4, fixed_abs, tag = 'smem constant byte address 0x4 - core index']
  #allocation1 [shape = 'u32[144,128]{1,0:T(1,128)}', space=vmem, size = 0x12000, scoped, tag = 'internal scratch']
  %s0 = inlined_call_operand.hbm [shape: f32[32,128], index: 0, kind: input, shape index: {}]
  %s1 = inlined_call_operand.hbm [shape: f32[128,128], index: 1, kind: input, shape index: {}]
  %s2 = inlined_call_operand.vmem [shape: f32[1,128], index: 2, kind: input, shape index: {}]
  %s3 = inlined_call_operand.hbm [shape: f32[32,128], index: 3, kind: output, shape index: {}]
  %s4 = sld [smem:[#allocation0]]
  $region30: #{tpu_custom_call.1} parent=0
    _
  %s6 = ssub.s32 1, %s4
  %s7 = scalar_select 0, %s6, %s4
  $region1: #{tpu_custom_call.1} parent=0
    #allocation2 [shape = 'u8[16384]{0}', space=vmem, size = 0x4000, scoped, tag = 'input window, operand 0, single buffered']
    #allocation3 [shape = 's32[1]{0}', space=sflag, size = 0x4, scoped, tag = 'scoped memory for tpu_custom_call.1']
    #allocation4 [shape = 's32[1]{0}', space=sflag, size = 0x4, scoped, tag = 'scoped memory for tpu_custom_call.1']
    #allocation5 [shape = 'u8[65536]{0}', space=vmem, size = 0x10000, scoped, tag = 'input window, operand 1, single buffered']
    #allocation6 [shape = 's32[1]{0}', space=sflag, size = 0x4, scoped, tag = 'scoped memory for tpu_custom_call.1']
    #allocation7 [shape = 'u8[16384]{0}', space=vmem, size = 0x4000, scoped, tag = 'output window, operand 0, single buffered']
    %8 = vsyncpa [#allocation3], 0
    %9 = vsyncpa [#allocation6], 0
    %10 = vsyncpa [#allocation4], 0
    // Predicated region
    $region2: #{tpu_custom_call.1} parent=1 // pred_check
      _
    $region3: #{tpu_custom_call.1} parent=1 // pred_check_branch
      %12 = sbr.rel (0) target = $region5
    $region4: #{tpu_custom_call.1} parent=1 // pred_region
      %s14 = ssub.s32 512, 512
      %15 = vsyncadd [#allocation3], %s14
      %s16 = sshll.u32 [#allocation2], 4
      %s17 = int_to_ptr.vmem [resolvable:$true] %s16
      %22 = dma.hbm_to_vmem [thread:$0]  %s0, 512, %s17, [#allocation3], 128, 128, 8
    $region5: #{tpu_custom_call.1} parent=1 // pred_fallthru
      _
    // Predicated region
    $region6: #{tpu_custom_call.1} parent=1 // pred_check
      _
    $region7: #{tpu_custom_call.1} parent=1 // pred_check_branch
      %24 = sbr.rel (0) target = $region9
    $region8: #{tpu_custom_call.1} parent=1 // pred_region
      %s26 = ssub.s32 2048, 2048
      %27 = vsyncadd [#allocation6], %s26
      %s28 = sshll.u32 [#allocation5], 4
      %s29 = int_to_ptr.vmem [resolvable:$true] %s28
      %34 = dma.hbm_to_vmem [thread:$0]  %s1, 2048, %s29, [#allocation6], 128, 128, 8
    $region9: #{tpu_custom_call.1} parent=1 // pred_fallthru
      _
    // Predicated region
    $region10: #{tpu_custom_call.1} parent=1 // pred_check
      _
    $region11: #{tpu_custom_call.1} parent=1 // pred_check_branch
      %36 = sbr.rel (0) target = $region13
    $region12: #{tpu_custom_call.1} parent=1 // pred_region
      _
    $region13: #{tpu_custom_call.1} parent=1 // pred_fallthru
      _
    // Predicated region
    $region14: #{tpu_custom_call.1} parent=1 // pred_check
      _
    $region15: #{tpu_custom_call.1} parent=1 // pred_check_branch
      %38 = sbr.rel (0) target = $region17
    $region16: #{tpu_custom_call.1} parent=1 // pred_region
      %39 = dma.done [#allocation3], 512
    $region17: #{tpu_custom_call.1} parent=1 // pred_fallthru
      _
    // Predicated region
    $region18: #{tpu_custom_call.1} parent=1 // pred_check
      _
    $region19: #{tpu_custom_call.1} parent=1 // pred_check_branch
      %41 = sbr.rel (0) target = $region21
    $region20: #{tpu_custom_call.1} parent=1 // pred_region
      %42 = dma.done [#allocation6], 2048
    $region21: #{tpu_custom_call.1} parent=1 // pred_fallthru
      _
    %v43 = vld [vmem:[#allocation2] sm:$0xff]
    %v44 = vld [vmem:[#allocation2 + $0x8] sm:$0xff]
    %v45 = vld [vmem:[#allocation2 + $0x10] sm:$0xff]
    %v46 = vld [vmem:[#allocation2 + $0x18] sm:$0xff]
    %v47 = vld [vmem:[#allocation5] sm:$0xff]
    %v48 = vld [vmem:[#allocation5 + $0x8] sm:$0xff]
    %v49 = vld [vmem:[#allocation5 + $0x10] sm:$0xff]
    %v50 = vld [vmem:[#allocation5 + $0x18] sm:$0xff]
    %v51 = vld [vmem:[#allocation5 + $0x20] sm:$0xff]
    %v52 = vld [vmem:[#allocation5 + $0x28] sm:$0xff]
    %v53 = vld [vmem:[#allocation5 + $0x30] sm:$0xff]
    %v54 = vld [vmem:[#allocation5 + $0x38] sm:$0xff]
    %v55 = vld [vmem:[#allocation5 + $0x40] sm:$0xff]
    %v56 = vld [vmem:[#allocation5 + $0x48] sm:$0xff]
    %v57 = vld [vmem:[#allocation5 + $0x50] sm:$0xff]
    %v58 = vld [vmem:[#allocation5 + $0x58] sm:$0xff]
    %v59 = vld [vmem:[#allocation5 + $0x60] sm:$0xff]
    %v60 = vld [vmem:[#allocation5 + $0x68] sm:$0xff]
    %v61 = vld [vmem:[#allocation5 + $0x70] sm:$0xff]
    %v62 = vld [vmem:[#allocation5 + $0x78] sm:$0xff]
    %v63 = vld [vmem:[%s2] sm:$0x1]
    %v65 = vlaneseq
    %v66 = vshrl.u32 %v65, 7
    %v67 = vsub.s32 0, %v66
    %v68 = vrot.slane %v63, %v67
    %70 = vmatprep.subr.mxu0 0.0
    %71 = vmatpush1.msra.mxu0 %v47
    %72 = vmatprep.subr.mxu0 0.0
    %73 = vmatpush1.msra.mxu0 %v48
    %74 = vmatprep.subr.mxu0 0.0
    %75 = vmatpush1.msra.mxu0 %v49
    %76 = vmatprep.subr.mxu0 0.0
    %77 = vmatpush1.msra.mxu0 %v50
    %78 = vmatprep.subr.mxu0 0.0
    %79 = vmatpush1.msra.mxu0 %v51
    %80 = vmatprep.subr.mxu0 0.0
    %81 = vmatpush1.msra.mxu0 %v52
    %82 = vmatprep.subr.mxu0 0.0
    %83 = vmatpush1.msra.mxu0 %v53
    %84 = vmatprep.subr.mxu0 0.0
    %85 = vmatpush1.msra.mxu0 %v54
    %86 = vmatprep.subr.mxu0 0.0
    %87 = vmatpush1.msra.mxu0 %v55
    %88 = vmatprep.subr.mxu0 0.0
    %89 = vmatpush1.msra.mxu0 %v56
    %90 = vmatprep.subr.mxu0 0.0
    %91 = vmatpush1.msra.mxu0 %v57
    %92 = vmatprep.subr.mxu0 0.0
    %93 = vmatpush1.msra.mxu0 %v58
    %94 = vmatprep.subr.mxu0 0.0
    %95 = vmatpush1.msra.mxu0 %v59
    %96 = vmatprep.subr.mxu0 0.0
    %97 = vmatpush1.msra.mxu0 %v60
    %98 = vmatprep.subr.mxu0 0.0
    %99 = vmatpush1.msra.mxu0 %v61
    %100 = vmatprep.subr.mxu0 0.0
    %101 = vmatpush1.msra.mxu0 %v62
    %102 = vmatprep.subr.mxu0 0.0
    %103 = vmatpush1.msra.mxu0 0.0
    %104 = vmatprep.subr.mxu0 0.0
    %105 = vmatpush1.msra.mxu0 0.0
    %106 = vmatprep.subr.mxu0 0.0
    %107 = vmatpush1.msra.mxu0 0.0
    %108 = vmatprep.subr.mxu0 0.0
    %109 = vmatpush1.msra.mxu0 0.0
    %110 = vmatprep.subr.mxu0 0.0
    %111 = vmatpush1.msra.mxu0 0.0
    %112 = vmatprep.subr.mxu0 0.0
    %113 = vmatpush1.msra.mxu0 0.0
    %114 = vmatprep.subr.mxu0 0.0
    %115 = vmatpush1.msra.mxu0 0.0
    %116 = vmatprep.subr.mxu0 0.0
    %117 = vmatpush1.msra.mxu0 0.0
    %118 = vmatprep.subr.mxu0 0.0
    %119 = vmatpush1.msra.mxu0 0.0
    %120 = vmatprep.subr.mxu0 0.0
    %121 = vmatpush1.msra.mxu0 0.0
    %122 = vmatprep.subr.mxu0 0.0
    %123 = vmatpush1.msra.mxu0 0.0
    %124 = vmatprep.subr.mxu0 0.0
    %125 = vmatpush1.msra.mxu0 0.0
    %126 = vmatprep.subr.mxu0 0.0
    %127 = vmatpush1.msra.mxu0 0.0
    %128 = vmatprep.subr.mxu0 0.0
    %129 = vmatpush1.msra.mxu0 0.0
    %130 = vmatprep.subr.mxu0 0.0
    %131 = vmatpush1.msra.mxu0 0.0
    %132 = vmatprep.subr.mxu0 0.0
    %133 = vmatpush1.msra.mxu0 0.0
    %134 = vmatprep.mubr.f32.mxu0 0.0
    %135 = vmatmul.mubr.f32.gmra.mrb[0].mxu0 %v43
    %v136 = vpop.f32.mrb[0].mxu0
    %v137 = vadd.f32 %v68, %v136
    %v138 = vpop.f32.mrb[0].mxu0
    %139 = vmatprep.mubr.f32.mxu0 0.0
    %140 = vmatmul.mubr.f32.gmra.mrb[0].mxu0 %v44
    %v141 = vpop.f32.mrb[0].mxu0
    %v142 = vadd.f32 %v68, %v141
    %v143 = vpop.f32.mrb[0].mxu0
    %144 = vmatprep.mubr.f32.mxu0 0.0
    %145 = vmatmul.mubr.f32.gmra.mrb[0].mxu0 %v45
    %v146 = vpop.f32.mrb[0].mxu0
    %v147 = vadd.f32 %v68, %v146
    %v148 = vpop.f32.mrb[0].mxu0
    %149 = vmatprep.mubr.f32.mxu0 0.0
    %150 = vmatmul.mubr.f32.gmra.mrb[0].mxu0 %v46
    %v151 = vpop.f32.mrb[0].mxu0
    %v152 = vadd.f32 %v68, %v151
    %v153 = vpop.f32.mrb[0].mxu0
    %154 = vdwg.mxu0
    %155 = vst [vmem:[#allocation7] sm:$0xff] %v137
    %156 = vst [vmem:[#allocation7 + $0x8] sm:$0xff] %v142
    %157 = vst [vmem:[#allocation7 + $0x10] sm:$0xff] %v147
    %158 = vst [vmem:[#allocation7 + $0x18] sm:$0xff] %v152
    // Predicated region
    $region22: #{tpu_custom_call.1} parent=1 // pred_check
      _
    $region23: #{tpu_custom_call.1} parent=1 // pred_check_branch
      %160 = sbr.rel (0) target = $region25
    $region24: #{tpu_custom_call.1} parent=1 // pred_region
      %s162 = ssub.s32 512, 512
      %163 = vsyncadd [#allocation4], %s162
      %s164 = sshll.u32 [#allocation7], 4
      %s165 = int_to_ptr.vmem [resolvable:$true] %s164
      %170 = dma.vmem_to_hbm [thread:$0]  %s165, 512, %s3, [#allocation4], 128, 128, 8
    $region25: #{tpu_custom_call.1} parent=1 // pred_fallthru
      _
    // Predicated region
    $region26: #{tpu_custom_call.1} parent=1 // pred_check
      _
    $region27: #{tpu_custom_call.1} parent=1 // pred_check_branch
      %172 = sbr.rel (0) target = $region29
    $region28: #{tpu_custom_call.1} parent=1 // pred_region
      %173 = dma.done [#allocation4], 512
    $region29: #{tpu_custom_call.1} parent=1 // pred_fallthru
      _
    %174 = vsyncpa [#allocation3], 1
    %175 = vsyncpa [#allocation6], 1
    %176 = vsyncpa [#allocation4], 1

</llo_original>
